<compile_context>
chip_gen: v7x
topology: tpu7x:2x2x1
jax: 0.10.0
libtpu: 0.0.40
codegen_flags: <defaults>
</compile_context>

<pallas_src>
import math

import jax
import jax.numpy as jnp
from jax import lax
from jax.experimental import pallas as pl
from jax.experimental.pallas import tpu as pltpu


def _mlp_kernel(x_ref, w1_ref, b1_ref, w2_ref, b2_ref, o_ref, acc_ref):
    """One (row-tile, hidden-tile) grid step.

    x_ref  : (tm, d_in)         activation rows for this tile
    w1_ref : (th, d_in)         fc1 weight chunk  (PyTorch (out, in) layout, no transpose)
    b1_ref : (1, th)            fc1 bias chunk
    w2_ref : (d_out, th)        fc2 weight chunk  (PyTorch (out, in) layout, no transpose)
    b2_ref : (1, d_out)         fc2 bias
    o_ref  : (tm, d_out)        output rows
    acc_ref: (tm, d_out) f32    VMEM accumulator over hidden chunks
    """
    hk = pl.program_id(1)

    @pl.when(hk == 0)
    def _():
        acc_ref[...] = jnp.zeros_like(acc_ref)

    # fc1 chunk: contract over d_in (last dim of both operands) -> (tm, th), f32 MXU accumulation.
    h = lax.dot_general(
        x_ref[...], w1_ref[...],
        dimension_numbers=(((1,), (1,)), ((), ())),
        preferred_element_type=jnp.float32)
    h = jnp.maximum(h + b1_ref[...].astype(jnp.float32), 0.0)     # fc1 bias + ReLU (VPU, fused)

    # fc2 partial over this hidden chunk: exact, since ReLU is elementwise over hidden.
    acc_ref[...] += lax.dot_general(
        h.astype(w2_ref.dtype), w2_ref[...],
        dimension_numbers=(((1,), (1,)), ((), ())),
        preferred_element_type=jnp.float32)

    @pl.when(hk == pl.num_programs(1) - 1)
    def _():
        o_ref[...] = (acc_ref[...] + b2_ref[...].astype(jnp.float32)).astype(o_ref.dtype)


def _round_up(a, b):
    return (a + b - 1) // b * b


_WEIGHT_VMEM_BUDGET = 32 * 1024 * 1024   # resident / per-step weight buffer budget (v7x-safe)


def mlp_forward(x, w1, b1, w2, b2, *, block_m=256, hidden_tile=None):
    """Fused MLP forward: fc2(relu(fc1(x))).

    x : (..., in_features)
    w1: (hidden, in_features),  b1: (hidden,)        -- PyTorch nn.Linear layout, used as-is
    w2: (out_features, hidden), b2: (out_features,)
    Runs in the caller's dtype (f32 or bf16); matmuls accumulate in f32 on the MXU.
    """
    orig_lead = x.shape[:-1]
    d_in = x.shape[-1]
    m = math.prod(orig_lead) if orig_lead else 1
    hidden = w1.shape[0]
    d_out = w2.shape[0]

    x2 = x.reshape(m, d_in)            # view only; no HBM round trip, no activation padding
    b1r = b1.reshape(1, hidden)
    b2r = b2.reshape(1, d_out)

    x_isz = jnp.dtype(x.dtype).itemsize
    w_isz = jnp.dtype(w1.dtype).itemsize

    # ---------------- row tiling ----------------
    if m <= block_m:
        tm = m                          # whole-M block equals the full array dim
        if m > 128:
            # Give v7x's second TensorCore work: at least 2 row steps once M is non-trivial.
            tm = max(128, _round_up(pl.cdiv(m, 2), 8))
    else:
        tm = block_m
    n_row = pl.cdiv(m, tm)              # ragged last row tile is masked by Pallas (rows never mix)

    # ---------------- hidden tiling (keeps weight buffers inside VMEM) ----------------
    resident_bytes = (hidden * (d_in + d_out + 1) + d_out) * w_isz
    if hidden_tile is not None:
        th = hidden_tile
    elif resident_bytes <= _WEIGHT_VMEM_BUDGET:
        th = hidden                     # weights fully resident, single hidden step
    else:
        max_th = _WEIGHT_VMEM_BUDGET // (2 * (d_in + d_out) * w_isz)   # double-buffered chunks
        th = max(128, (max_th // 128) * 128)
        # TODO(synk): if d_in/d_out alone exceed the budget they need their own grid axes too.
    th = min(th, hidden)
    hidden_p = _round_up(hidden, th)
    if hidden_p != hidden:
        # Zero-pad hidden: relu(x @ 0 + 0) = 0 contributes nothing through w2's zero columns.
        # TODO(synk): for very large weights do this once at parameter-prep time, not per call.
        w1 = jnp.pad(w1, ((0, hidden_p - hidden), (0, 0)))
        w2 = jnp.pad(w2, ((0, 0), (0, hidden_p - hidden)))
        b1r = jnp.pad(b1r, ((0, 0), (0, hidden_p - hidden)))
    n_hid = hidden_p // th

    # Blocks whose index never changes only need a single VMEM buffer.
    resident = pl.Buffered(1)
    w_mode = resident if n_hid == 1 else None      # weight chunks rotate when hidden is tiled

    # ---------------- VMEM budget (<=48 MiB: headroom under v7x's 64 MiB) ----------------
    w_bufs = 1 if n_hid == 1 else 2
    vmem_bytes = (
        2 * tm * d_in * x_isz + 2 * tm * d_out * x_isz + 4 * tm * d_out
        + w_bufs * th * (d_in + d_out + 1) * w_isz + d_out * w_isz
    )
    vmem_limit = min(48 * 1024 * 1024,
                     max(32 * 1024 * 1024, int(vmem_bytes * 1.25) + (2 << 20)))

    cost = pl.CostEstimate(
        flops=2 * m * d_in * hidden + 2 * m * hidden * d_out,
        transcendentals=0,
        bytes_accessed=x_isz * m * (d_in + d_out)
        + w_isz * (hidden * (d_in + d_out + 1) + d_out),
    )

    out = pl.pallas_call(
        _mlp_kernel,
        out_shape=jax.ShapeDtypeStruct((m, d_out), x.dtype),
        grid_spec=pltpu.PrefetchScalarGridSpec(
            num_scalar_prefetch=0,
            grid=(n_row, n_hid),
            in_specs=[
                pl.BlockSpec((tm, d_in), lambda i, k: (i, 0)),                         # x rows
                pl.BlockSpec((th, d_in), lambda i, k: (k, 0), pipeline_mode=w_mode),   # fc1 W
                pl.BlockSpec((1, th), lambda i, k: (0, k), pipeline_mode=w_mode),      # fc1 b
                pl.BlockSpec((d_out, th), lambda i, k: (0, k), pipeline_mode=w_mode),  # fc2 W
                pl.BlockSpec((1, d_out), lambda i, k: (0, 0), pipeline_mode=resident), # fc2 b
            ],
            out_specs=pl.BlockSpec((tm, d_out), lambda i, k: (i, 0)),
            scratch_shapes=[pltpu.VMEM((tm, d_out), jnp.float32)],
        ),
        compiler_params=pltpu.CompilerParams(
            dimension_semantics=("parallel", "arbitrary"),   # rows parallel, hidden is a reduction
            vmem_limit_bytes=vmem_limit,
        ),
        cost_estimate=cost,
    )(x2, w1, b1r, w2, b2r)

    return out.reshape(*orig_lead, d_out)


def _reference(x, w1, b1, w2, b2):
    h = jnp.maximum(x @ w1.T + b1, 0.0)
    return h @ w2.T + b2


if __name__ == "__main__":
    key = jax.random.PRNGKey(0)
    kx, k1, k2, k3, k4 = jax.random.split(key, 5)

    # Small, lane-dense shapes: batch=2, seq=8, in_features=128, hidden=256, out=128.
    B, S, D_IN, HID, D_OUT = 2, 8, 128, 256, 128
    x = jax.random.normal(kx, (B, S, D_IN), dtype=jnp.float32)

    # PyTorch nn.Linear-style uniform init: U(-1/sqrt(fan_in), 1/sqrt(fan_in)).
    bnd1 = 1.0 / math.sqrt(D_IN)
    w1 = jax.random.uniform(k1, (HID, D_IN), minval=-bnd1, maxval=bnd1, dtype=jnp.float32)
    b1 = jax.random.uniform(k2, (HID,), minval=-bnd1, maxval=bnd1, dtype=jnp.float32)
    bnd2 = 1.0 / math.sqrt(HID)
    w2 = jax.random.uniform(k3, (D_OUT, HID), minval=-bnd2, maxval=bnd2, dtype=jnp.float32)
    b2 = jax.random.uniform(k4, (D_OUT,), minval=-bnd2, maxval=bnd2, dtype=jnp.float32)

    ref = _reference(x, w1, b1, w2, b2)

    # 1) f32, weights fully resident (single hidden step).
    out = jax.block_until_ready(mlp_forward(x, w1, b1, w2, b2))
    assert out.shape == (B, S, D_OUT)
    assert jnp.allclose(out, ref, atol=1e-4, rtol=1e-4)

    # 2) Exercise the row-tiled + hidden-tiled accumulator path (grid = (2, 2)).
    out_tiled = jax.block_until_ready(
        mlp_forward(x, w1, b1, w2, b2, block_m=8, hidden_tile=128))
    assert jnp.allclose(out_tiled, ref, atol=1e-4, rtol=1e-4)

    # 3) bf16 end-to-end (MXU-native dtype), compared loosely against the f32 reference.
    out_bf16 = jax.block_until_ready(
        mlp_forward(x.astype(jnp.bfloat16), w1.astype(jnp.bfloat16), b1.astype(jnp.bfloat16),
                    w2.astype(jnp.bfloat16), b2.astype(jnp.bfloat16)))
    assert out_bf16.dtype == jnp.bfloat16
    assert jnp.allclose(out_bf16.astype(jnp.float32), ref, atol=1e-1, rtol=1e-1)

    print("KERNEL_OK")
</pallas_src>

<mosaic_0001>
module attributes {stable_mosaic.version = 11 : i64} {
  func.func @_mlp_kernel(%arg0: i32, %arg1: i32, %arg2: memref<16x128xf32, #tpu.memory_space<vmem>>, %arg3: memref<256x128xf32, #tpu.memory_space<vmem>>, %arg4: memref<1x256xf32, #tpu.memory_space<vmem>>, %arg5: memref<128x256xf32, #tpu.memory_space<vmem>>, %arg6: memref<1x128xf32, #tpu.memory_space<vmem>>, %arg7: memref<16x128xf32, #tpu.memory_space<vmem>>, %arg8: memref<16x128xf32, #tpu.memory_space<vmem>>) attributes {dimension_semantics = [#tpu.dimension_semantics<parallel>, #tpu.dimension_semantics<arbitrary>], iteration_bounds = array<i64: 1, 1>, scalar_prefetch = 0 : i64, scratch_operands = 1 : i64, tpu.core_type = #tpu.core_type<tc>, window_params = [{transform_indices = @transform_0, window_bounds = array<i64: 16, 128>}, {pipeline_mode = #tpu.pipeline_mode<synchronous>, transform_indices = @transform_1, window_bounds = array<i64: 256, 128>}, {pipeline_mode = #tpu.pipeline_mode<synchronous>, transform_indices = @transform_2, window_bounds = array<i64: 1, 256>}, {pipeline_mode = #tpu.pipeline_mode<synchronous>, transform_indices = @transform_3, window_bounds = array<i64: 128, 256>}, {pipeline_mode = #tpu.pipeline_mode<synchronous>, transform_indices = @transform_4, window_bounds = array<i64: 1, 128>}, {transform_indices = @transform_5, window_bounds = array<i64: 16, 128>}]} {
    %c0_i32 = arith.constant 0 : i32
    %0 = arith.cmpi eq, %arg1, %c0_i32 : i32
    %1 = arith.extui %0 : i1 to i32
    %c0_i32_0 = arith.constant 0 : i32
    %2 = arith.cmpi ne, %1, %c0_i32_0 : i32
    scf.if %2 {
      %cst_16 = arith.constant 0.000000e+00 : f32
      %19 = vector.broadcast %cst_16 : f32 to vector<16x128xf32>
      %c0_17 = arith.constant 0 : index
      %c0_18 = arith.constant 0 : index
      %20 = vector.load %arg8[%c0_17, %c0_18] : memref<16x128xf32, #tpu.memory_space<vmem>>, vector<16x128xf32>
      tpu.vector_store %arg8[%c0_17, %c0_18], %19 {strides = array<i32>} : memref<16x128xf32, #tpu.memory_space<vmem>>, vector<16x128xf32>,
    } else {
    }
    %c0 = arith.constant 0 : index
    %c0_1 = arith.constant 0 : index
    %3 = vector.load %arg2[%c0, %c0_1] : memref<16x128xf32, #tpu.memory_space<vmem>>, vector<16x128xf32>
    %c0_2 = arith.constant 0 : index
    %c0_3 = arith.constant 0 : index
    %4 = vector.load %arg3[%c0_2, %c0_3] : memref<256x128xf32, #tpu.memory_space<vmem>>, vector<256x128xf32>
    %cst = arith.constant dense<0.000000e+00> : vector<16x256xf32>
    %5 = tpu.matmul %3, %4, %cst {dimension_numbers = #tpu.dot_dimension_numbers<[1], [1], [0], [0], [0, 0, 1, 0], [], []>} : vector<16x128xf32>, vector<256x128xf32>, vector<16x256xf32> -> vector<16x256xf32>
    %c0_4 = arith.constant 0 : index
    %c0_5 = arith.constant 0 : index
    %6 = vector.load %arg4[%c0_4, %c0_5] : memref<1x256xf32, #tpu.memory_space<vmem>>, vector<1x256xf32>
    %7 = vector.broadcast %6 : vector<1x256xf32> to vector<16x256xf32>
    %8 = arith.addf %5, %7 : vector<16x256xf32>
    %cst_6 = arith.constant 0.000000e+00 : f32
    %9 = vector.broadcast %cst_6 : f32 to vector<16x256xf32>
    %10 = arith.maximumf %8, %9 : vector<16x256xf32>
    %c0_7 = arith.constant 0 : index
    %c0_8 = arith.constant 0 : index
    %11 = vector.load %arg8[%c0_7, %c0_8] : memref<16x128xf32, #tpu.memory_space<vmem>>, vector<16x128xf32>
    %c0_9 = arith.constant 0 : index
    %c0_10 = arith.constant 0 : index
    %12 = vector.load %arg5[%c0_9, %c0_10] : memref<128x256xf32, #tpu.memory_space<vmem>>, vector<128x256xf32>
    %cst_11 = arith.constant dense<0.000000e+00> : vector<16x128xf32>
    %13 = tpu.matmul %10, %12, %cst_11 {dimension_numbers = #tpu.dot_dimension_numbers<[1], [1], [0], [0], [0, 0, 1, 0], [], []>} : vector<16x256xf32>, vector<128x256xf32>, vector<16x128xf32> -> vector<16x128xf32>
    %14 = arith.addf %11, %13 : vector<16x128xf32>
    %c0_12 = arith.constant 0 : index
    %c0_13 = arith.constant 0 : index
    %15 = vector.load %arg8[%c0_12, %c0_13] : memref<16x128xf32, #tpu.memory_space<vmem>>, vector<16x128xf32>
    tpu.vector_store %arg8[%c0_12, %c0_13], %14 {strides = array<i32>} : memref<16x128xf32, #tpu.memory_space<vmem>>, vector<16x128xf32>,
    %c0_i32_14 = arith.constant 0 : i32
    %16 = arith.cmpi eq, %arg1, %c0_i32_14 : i32
    %17 = arith.extui %16 : i1 to i32
    %c0_i32_15 = arith.constant 0 : i32
    %18 = arith.cmpi ne, %17, %c0_i32_15 : i32
    scf.if %18 {
      %c0_16 = arith.constant 0 : index
      %c0_17 = arith.constant 0 : index
      %19 = vector.load %arg8[%c0_16, %c0_17] : memref<16x128xf32, #tpu.memory_space<vmem>>, vector<16x128xf32>
      %c0_18 = arith.constant 0 : index
      %c0_19 = arith.constant 0 : index
      %20 = vector.load %arg6[%c0_18, %c0_19] : memref<1x128xf32, #tpu.memory_space<vmem>>, vector<1x128xf32>
      %21 = vector.broadcast %20 : vector<1x128xf32> to vector<16x128xf32>
      %22 = arith.addf %19, %21 : vector<16x128xf32>
      %c0_20 = arith.constant 0 : index
      %c0_21 = arith.constant 0 : index
      %23 = vector.load %arg7[%c0_20, %c0_21] : memref<16x128xf32, #tpu.memory_space<vmem>>, vector<16x128xf32>
      tpu.vector_store %arg7[%c0_20, %c0_21], %22 {strides = array<i32>} : memref<16x128xf32, #tpu.memory_space<vmem>>, vector<16x128xf32>,
    } else {
    }
    return
  }
  func.func @transform_0(%arg0: i32, %arg1: i32) -> (i32, i32) {
    %c0_i32 = arith.constant 0 : i32
    %c0_i32_0 = arith.constant 0 : i32
    return %arg0, %c0_i32 : i32, i32
  }
  func.func @transform_1(%arg0: i32, %arg1: i32) -> (i32, i32) {
    %c0_i32 = arith.constant 0 : i32
    %c0_i32_0 = arith.constant 0 : i32
    return %arg1, %c0_i32 : i32, i32
  }
  func.func @transform_2(%arg0: i32, %arg1: i32) -> (i32, i32) {
    %c0_i32 = arith.constant 0 : i32
    %c0_i32_0 = arith.constant 0 : i32
    return %c0_i32, %arg1 : i32, i32
  }
  func.func @transform_3(%arg0: i32, %arg1: i32) -> (i32, i32) {
    %c0_i32 = arith.constant 0 : i32
    %c0_i32_0 = arith.constant 0 : i32
    return %c0_i32, %arg1 : i32, i32
  }
  func.func @transform_4(%arg0: i32, %arg1: i32) -> (i32, i32) {
    %c0_i32 = arith.constant 0 : i32
    %c0_i32_0 = arith.constant 0 : i32
    %c0_i32_1 = arith.constant 0 : i32
    return %c0_i32, %c0_i32_0 : i32, i32
  }
  func.func @transform_5(%arg0: i32, %arg1: i32) -> (i32, i32) {
    %c0_i32 = arith.constant 0 : i32
    %c0_i32_0 = arith.constant 0 : i32
    return %arg0, %c0_i32 : i32, i32
  }
}

</mosaic_0001>

<llo_original>
// kernel: tpu_custom_call.1
$region0: #{tpu_custom_call.1}
  #allocation0 [shape = 'u32[]', space=smem, size = 0x4, offset = 0x4, fixed_abs, tag = 'smem constant byte address 0x4 - core index']
  #allocation1 [shape = 'u32[144,128]{1,0:T(1,128)}', space=vmem, size = 0x12000, scoped, tag = 'internal scratch']
  #allocation2 [shape = 'f32[16,128]{1,0:T(8,128)}', space=vmem, size = 0x2000, scoped, tag = 'scratch operand']
  %s0 = inlined_call_operand.hbm [shape: f32[16,128], index: 0, kind: input, shape index: {}]
  %s1 = inlined_call_operand.hbm [shape: f32[256,128], index: 1, kind: input, shape index: {}]
  %s2 = inlined_call_operand.vmem [shape: f32[1,256], index: 2, kind: input, shape index: {}]
  %s3 = inlined_call_operand.hbm [shape: f32[128,256], index: 3, kind: input, shape index: {}]
  %s4 = inlined_call_operand.vmem [shape: f32[1,128], index: 4, kind: input, shape index: {}]
  %s5 = inlined_call_operand.hbm [shape: f32[16,128], index: 5, kind: output, shape index: {}]
  %s6 = sld [smem:[#allocation0]]
  $region50: #{tpu_custom_call.1} parent=0
    _
  %s8 = ssub.s32 1, %s6
  %s9 = scalar_select 0, %s8, %s6
  $region1: #{tpu_custom_call.1} parent=0
    #allocation3 [shape = 'u8[8192]{0}', space=vmem, size = 0x2000, scoped, tag = 'input window, operand 0, single buffered']
    #allocation4 [shape = 's32[1]{0}', space=sflag, size = 0x4, scoped, tag = 'scoped memory for tpu_custom_call.1']
    #allocation5 [shape = 's32[1]{0}', space=sflag, size = 0x4, scoped, tag = 'scoped memory for tpu_custom_call.1']
    #allocation6 [shape = 'u8[131072]{0}', space=vmem, size = 0x20000, scoped, tag = 'input window, operand 1, single buffered']
    #allocation7 [shape = 's32[1]{0}', space=sflag, size = 0x4, scoped, tag = 'scoped memory for tpu_custom_call.1']
    #allocation8 [shape = 'u8[131072]{0}', space=vmem, size = 0x20000, scoped, tag = 'input window, operand 3, single buffered']
    #allocation9 [shape = 'u8[8192]{0}', space=vmem, size = 0x2000, scoped, tag = 'output window, operand 0, single buffered']
    %10 = vsyncpa [#allocation4], 0
    %11 = vsyncpa [#allocation7], 0
    %12 = vsyncpa [#allocation5], 0
    // Predicated region
    $region2: #{tpu_custom_call.1} parent=1 // pred_check
      _
    $region3: #{tpu_custom_call.1} parent=1 // pred_check_branch
      %14 = sbr.rel (0) target = $region5
    $region4: #{tpu_custom_call.1} parent=1 // pred_region
      %s16 = ssub.s32 256, 256
      %17 = vsyncadd [#allocation4], %s16
      %s18 = sshll.u32 [#allocation3], 4
      %s19 = int_to_ptr.vmem [resolvable:$true] %s18
      %24 = dma.hbm_to_vmem [thread:$0]  %s0, 256, %s19, [#allocation4], 128, 128, 8
    $region5: #{tpu_custom_call.1} parent=1 // pred_fallthru
      _
    // Predicated region
    $region6: #{tpu_custom_call.1} parent=1 // pred_check
      _
    $region7: #{tpu_custom_call.1} parent=1 // pred_check_branch
      %26 = sbr.rel (0) target = $region9
    $region8: #{tpu_custom_call.1} parent=1 // pred_region
      %s28 = ssub.s32 4096, 4096
      %29 = vsyncadd [#allocation7], %s28
      %s30 = sshll.u32 [#allocation6], 4
      %s31 = int_to_ptr.vmem [resolvable:$true] %s30
      %36 = dma.hbm_to_vmem [thread:$0]  %s1, 4096, %s31, [#allocation7], 128, 128, 8
    $region9: #{tpu_custom_call.1} parent=1 // pred_fallthru
      _
    // Predicated region
    $region10: #{tpu_custom_call.1} parent=1 // pred_check
      _
    $region11: #{tpu_custom_call.1} parent=1 // pred_check_branch
      %38 = sbr.rel (0) target = $region13
    $region12: #{tpu_custom_call.1} parent=1 // pred_region
      _
    $region13: #{tpu_custom_call.1} parent=1 // pred_fallthru
      _
    // Predicated region
    $region14: #{tpu_custom_call.1} parent=1 // pred_check
      _
    $region15: #{tpu_custom_call.1} parent=1 // pred_check_branch
      %40 = sbr.rel (0) target = $region17
    $region16: #{tpu_custom_call.1} parent=1 // pred_region
      %s42 = ssub.s32 4096, 4096
      %43 = vsyncadd [#allocation7], %s42
      %s44 = sshll.u32 [#allocation8], 4
      %s45 = int_to_ptr.vmem [resolvable:$true] %s44
      %50 = dma.hbm_to_vmem [thread:$0]  %s3, 4096, %s45, [#allocation7], 256, 256, 16
    $region17: #{tpu_custom_call.1} parent=1 // pred_fallthru
      _
    // Predicated region
    $region18: #{tpu_custom_call.1} parent=1 // pred_check
      _
    $region19: #{tpu_custom_call.1} parent=1 // pred_check_branch
      %52 = sbr.rel (0) target = $region21
    $region20: #{tpu_custom_call.1} parent=1 // pred_region
      _
    $region21: #{tpu_custom_call.1} parent=1 // pred_fallthru
      _
    // Predicated region
    $region22: #{tpu_custom_call.1} parent=1 // pred_check
      _
    $region23: #{tpu_custom_call.1} parent=1 // pred_check_branch
      %54 = sbr.rel (0) target = $region25
    $region24: #{tpu_custom_call.1} parent=1 // pred_region
      %55 = dma.done [#allocation4], 256
    $region25: #{tpu_custom_call.1} parent=1 // pred_fallthru
      _
    // Predicated region
    $region26: #{tpu_custom_call.1} parent=1 // pred_check
      _
    $region27: #{tpu_custom_call.1} parent=1 // pred_check_branch
      %57 = sbr.rel (0) target = $region29
    $region28: #{tpu_custom_call.1} parent=1 // pred_region
      %58 = dma.done [#allocation7], 4096
    $region29: #{tpu_custom_call.1} parent=1 // pred_fallthru
      _
    // Predicated region
    $region30: #{tpu_custom_call.1} parent=1 // pred_check
      _
    $region31: #{tpu_custom_call.1} parent=1 // pred_check_branch
      %60 = sbr.rel (0) target = $region33
    $region32: #{tpu_custom_call.1} parent=1 // pred_region
      %61 = dma.done [#allocation7], 4096
    $region33: #{tpu_custom_call.1} parent=1 // pred_fallthru
      _
    %p62 = scmp.eq.s32.totalorder 0, 0
    // Predicated region
    $region34: #{tpu_custom_call.1} parent=1 // pred_check
      %p63 = pneg %p62
    $region35: #{tpu_custom_call.1} parent=1 // pred_check_branch
      %65 = sbr.rel (%p63) target = $region37
    $region36: #{tpu_custom_call.1} parent=1 // pred_region
      %66 = vst [vmem:[#allocation2] sm:$0xff] 0.0
      %67 = vst [vmem:[#allocation2 + $0x8] sm:$0xff] 0.0
    $region37: #{tpu_custom_call.1} parent=1 // pred_fallthru
      _
    %v68 = vld [vmem:[#allocation3] sm:$0xff]
    %v69 = vld [vmem:[#allocation3 + $0x8] sm:$0xff]
    %v70 = vld [vmem:[#allocation6] sm:$0xff]
    %v71 = vld [vmem:[#allocation6 + $0x8] sm:$0xff]
    %v72 = vld [vmem:[#allocation6 + $0x10] sm:$0xff]
    %v73 = vld [vmem:[#allocation6 + $0x18] sm:$0xff]
    %v74 = vld [vmem:[#allocation6 + $0x20] sm:$0xff]
    %v75 = vld [vmem:[#allocation6 + $0x28] sm:$0xff]
    %v76 = vld [vmem:[#allocation6 + $0x30] sm:$0xff]
    %v77 = vld [vmem:[#allocation6 + $0x38] sm:$0xff]
    %v78 = vld [vmem:[#allocation6 + $0x40] sm:$0xff]
    %v79 = vld [vmem:[#allocation6 + $0x48] sm:$0xff]
    %v80 = vld [vmem:[#allocation6 + $0x50] sm:$0xff]
    %v81 = vld [vmem:[#allocation6 + $0x58] sm:$0xff]
    %v82 = vld [vmem:[#allocation6 + $0x60] sm:$0xff]
    %v83 = vld [vmem:[#allocation6 + $0x68] sm:$0xff]
    %v84 = vld [vmem:[#allocation6 + $0x70] sm:$0xff]
    %v85 = vld [vmem:[#allocation6 + $0x78] sm:$0xff]
    %v86 = vld [vmem:[#allocation6 + $0x80] sm:$0xff]
    %v87 = vld [vmem:[#allocation6 + $0x88] sm:$0xff]
    %v88 = vld [vmem:[#allocation6 + $0x90] sm:$0xff]
    %v89 = vld [vmem:[#allocation6 + $0x98] sm:$0xff]
    %v90 = vld [vmem:[#allocation6 + $0xa0] sm:$0xff]
    %v91 = vld [vmem:[#allocation6 + $0xa8] sm:$0xff]
    %v92 = vld [vmem:[#allocation6 + $0xb0] sm:$0xff]
    %v93 = vld [vmem:[#allocation6 + $0xb8] sm:$0xff]
    %v94 = vld [vmem:[#allocation6 + $0xc0] sm:$0xff]
    %v95 = vld [vmem:[#allocation6 + $0xc8] sm:$0xff]
    %v96 = vld [vmem:[#allocation6 + $0xd0] sm:$0xff]
    %v97 = vld [vmem:[#allocation6 + $0xd8] sm:$0xff]
    %v98 = vld [vmem:[#allocation6 + $0xe0] sm:$0xff]
    %v99 = vld [vmem:[#allocation6 + $0xe8] sm:$0xff]
    %v100 = vld [vmem:[#allocation6 + $0xf0] sm:$0xff]
    %v101 = vld [vmem:[#allocation6 + $0xf8] sm:$0xff]
    %v102 = vld [vmem:[%s2] sm:$0x3]
    %v104 = vlaneseq
    %v105 = vshrl.u32 %v104, 7
    %v106 = vsub.s32 0, %v105
    %v107 = vrot.slane %v102, %v106
    %v108 = vlaneseq
    %v109 = vshrl.u32 %v108, 7
    %v110 = vsub.s32 1, %v109
    %v111 = vrot.slane %v102, %v110
    %114 = vmatprep.subr.mxu0 0.0
    %115 = vmatpush1.xpose.msra.mxu0 %v70
    %116 = vmatprep.subr.mxu0 0.0
    %117 = vmatpush1.xpose.msra.mxu0 %v71
    %118 = vmatprep.subr.mxu0 0.0
    %119 = vmatpush1.xpose.msra.mxu0 %v72
    %120 = vmatprep.subr.mxu0 0.0
    %121 = vmatpush1.xpose.msra.mxu0 %v73
    %122 = vmatprep.subr.mxu0 0.0
    %123 = vmatpush1.xpose.msra.mxu0 %v74
    %124 = vmatprep.subr.mxu0 0.0
    %125 = vmatpush1.xpose.msra.mxu0 %v75
    %126 = vmatprep.subr.mxu0 0.0
    %127 = vmatpush1.xpose.msra.mxu0 %v76
    %128 = vmatprep.subr.mxu0 0.0
    %129 = vmatpush1.xpose.msra.mxu0 %v77
    %130 = vmatprep.subr.mxu0 0.0
    %131 = vmatpush1.xpose.msra.mxu0 %v78
    %132 = vmatprep.subr.mxu0 0.0
    %133 = vmatpush1.xpose.msra.mxu0 %v79
    %134 = vmatprep.subr.mxu0 0.0
    %135 = vmatpush1.xpose.msra.mxu0 %v80
    %136 = vmatprep.subr.mxu0 0.0
    %137 = vmatpush1.xpose.msra.mxu0 %v81
    %138 = vmatprep.subr.mxu0 0.0
    %139 = vmatpush1.xpose.msra.mxu0 %v82
    %140 = vmatprep.subr.mxu0 0.0
    %141 = vmatpush1.xpose.msra.mxu0 %v83
    %142 = vmatprep.subr.mxu0 0.0
    %143 = vmatpush1.xpose.msra.mxu0 %v84
    %144 = vmatprep.subr.mxu0 0.0
    %145 = vmatpush1.xpose.msra.mxu0 %v85
    %146 = vmatprep.subr.mxu0 0.0
    %147 = vmatpush1.xpose.msra.mxu0 %v86
    %148 = vmatprep.subr.mxu0 0.0
    %149 = vmatpush1.xpose.msra.mxu0 %v87
    %150 = vmatprep.subr.mxu0 0.0
    %151 = vmatpush1.xpose.msra.mxu0 %v88
    %152 = vmatprep.subr.mxu0 0.0
    %153 = vmatpush1.xpose.msra.mxu0 %v89
    %154 = vmatprep.subr.mxu0 0.0
    %155 = vmatpush1.xpose.msra.mxu0 %v90
    %156 = vmatprep.subr.mxu0 0.0
    %157 = vmatpush1.xpose.msra.mxu0 %v91
    %158 = vmatprep.subr.mxu0 0.0
    %159 = vmatpush1.xpose.msra.mxu0 %v92
    %160 = vmatprep.subr.mxu0 0.0
    %161 = vmatpush1.xpose.msra.mxu0 %v93
    %162 = vmatprep.subr.mxu0 0.0
    %163 = vmatpush1.xpose.msra.mxu0 %v94
    %164 = vmatprep.subr.mxu0 0.0
    %165 = vmatpush1.xpose.msra.mxu0 %v95
    %166 = vmatprep.subr.mxu0 0.0
    %167 = vmatpush1.xpose.msra.mxu0 %v96
    %168 = vmatprep.subr.mxu0 0.0
    %169 = vmatpush1.xpose.msra.mxu0 %v97
    %170 = vmatprep.subr.mxu0 0.0
    %171 = vmatpush1.xpose.msra.mxu0 %v98
    %172 = vmatprep.subr.mxu0 0.0
    %173 = vmatpush1.xpose.msra.mxu0 %v99
    %174 = vmatprep.subr.mxu0 0.0
    %175 = vmatpush1.xpose.msra.mxu0 %v100
    %176 = vmatprep.subr.mxu0 0.0
    %177 = vmatpush1.xpose.msra.mxu0 %v101
    %178 = vmatprep.mubr.f32.mxu0 0.0
    %179 = vmatmul.mubr.f32.gmra.mrb[0].mxu0 %v68
    %v180 = vpop.f32.mrb[0].mxu0
    %v181 = vadd.f32 %v107, %v180
    %v182 = vpop.f32.mrb[0].mxu0
    %v183 = vadd.f32 %v111, %v182
    %184 = vmatprep.mubr.f32.mxu0 0.0
    %185 = vmatmul.mubr.f32.gmra.mrb[0].mxu0 %v69
    %v186 = vpop.f32.mrb[0].mxu0
    %v187 = vadd.f32 %v107, %v186
    %v188 = vpop.f32.mrb[0].mxu0
    %v189 = vadd.f32 %v111, %v188
    %190 = vdwg.mxu0
    %v191 = vmax.f32 %v181, 0.0
    %v192 = vmax.f32 %v183, 0.0
    %v193 = vmax.f32 %v187, 0.0
    %v194 = vmax.f32 %v189, 0.0
    %v195 = vld [vmem:[#allocation2] sm:$0xff]
    %v196 = vld [vmem:[#allocation2 + $0x8] sm:$0xff]
    %v197 = vld [vmem:[#allocation8] sm:$0xff]
    %v198 = vld [vmem:[#allocation8 + $0x8] sm:$0xff]
    %v199 = vld [vmem:[#allocation8 + $0x10] sm:$0xff]
    %v200 = vld [vmem:[#allocation8 + $0x18] sm:$0xff]
    %v201 = vld [vmem:[#allocation8 + $0x20] sm:$0xff]
    %v202 = vld [vmem:[#allocation8 + $0x28] sm:$0xff]
    %v203 = vld [vmem:[#allocation8 + $0x30] sm:$0xff]
    %v204 = vld [vmem:[#allocation8 + $0x38] sm:$0xff]
    %v205 = vld [vmem:[#allocation8 + $0x40] sm:$0xff]
    %v206 = vld [vmem:[#allocation8 + $0x48] sm:$0xff]
    %v207 = vld [vmem:[#allocation8 + $0x50] sm:$0xff]
    %v208 = vld [vmem:[#allocation8 + $0x58] sm:$0xff]
    %v209 = vld [vmem:[#allocation8 + $0x60] sm:$0xff]
    %v210 = vld [vmem:[#allocation8 + $0x68] sm:$0xff]
    %v211 = vld [vmem:[#allocation8 + $0x70] sm:$0xff]
    %v212 = vld [vmem:[#allocation8 + $0x78] sm:$0xff]
    %v213 = vld [vmem:[#allocation8 + $0x80] sm:$0xff]
    %v214 = vld [vmem:[#allocation8 + $0x88] sm:$0xff]
    %v215 = vld [vmem:[#allocation8 + $0x90] sm:$0xff]
    %v216 = vld [vmem:[#allocation8 + $0x98] sm:$0xff]
    %v217 = vld [vmem:[#allocation8 + $0xa0] sm:$0xff]
    %v218 = vld [vmem:[#allocation8 + $0xa8] sm:$0xff]
    %v219 = vld [vmem:[#allocation8 + $0xb0] sm:$0xff]
    %v220 = vld [vmem:[#allocation8 + $0xb8] sm:$0xff]
    %v221 = vld [vmem:[#allocation8 + $0xc0] sm:$0xff]
    %v222 = vld [vmem:[#allocation8 + $0xc8] sm:$0xff]
    %v223 = vld [vmem:[#allocation8 + $0xd0] sm:$0xff]
    %v224 = vld [vmem:[#allocation8 + $0xd8] sm:$0xff]
    %v225 = vld [vmem:[#allocation8 + $0xe0] sm:$0xff]
    %v226 = vld [vmem:[#allocation8 + $0xe8] sm:$0xff]
    %v227 = vld [vmem:[#allocation8 + $0xf0] sm:$0xff]
    %v228 = vld [vmem:[#allocation8 + $0xf8] sm:$0xff]
    %229 = vmatprep.subr.mxu0 %v198
    %230 = vmatpush1.xpose.msra.mxu0 %v197
    %231 = vmatprep.subr.mxu0 %v200
    %232 = vmatpush1.xpose.msra.mxu0 %v199
    %233 = vmatprep.subr.mxu0 %v202
    %234 = vmatpush1.xpose.msra.mxu0 %v201
    %235 = vmatprep.subr.mxu0 %v204
    %236 = vmatpush1.xpose.msra.mxu0 %v203
    %237 = vmatprep.subr.mxu0 %v206
    %238 = vmatpush1.xpose.msra.mxu0 %v205
    %239 = vmatprep.subr.mxu0 %v208
    %240 = vmatpush1.xpose.msra.mxu0 %v207
    %241 = vmatprep.subr.mxu0 %v210
    %242 = vmatpush1.xpose.msra.mxu0 %v209
    %243 = vmatprep.subr.mxu0 %v212
    %244 = vmatpush1.xpose.msra.mxu0 %v211
    %245 = vmatprep.subr.mxu0 %v214
    %246 = vmatpush1.xpose.msra.mxu0 %v213
    %247 = vmatprep.subr.mxu0 %v216
    %248 = vmatpush1.xpose.msra.mxu0 %v215
    %249 = vmatprep.subr.mxu0 %v218
    %250 = vmatpush1.xpose.msra.mxu0 %v217
    %251 = vmatprep.subr.mxu0 %v220
    %252 = vmatpush1.xpose.msra.mxu0 %v219
    %253 = vmatprep.subr.mxu0 %v222
    %254 = vmatpush1.xpose.msra.mxu0 %v221
    %255 = vmatprep.subr.mxu0 %v224
    %256 = vmatpush1.xpose.msra.mxu0 %v223
    %257 = vmatprep.subr.mxu0 %v226
    %258 = vmatpush1.xpose.msra.mxu0 %v225
    %259 = vmatprep.subr.mxu0 %v228
    %260 = vmatpush1.xpose.msra.mxu0 %v227
    %261 = vmatprep.subr.mxu0 0.0
    %262 = vmatpush1.xpose.msra.mxu0 0.0
    %263 = vmatprep.subr.mxu0 0.0
    %264 = vmatpush1.xpose.msra.mxu0 0.0
    %265 = vmatprep.subr.mxu0 0.0
    %266 = vmatpush1.xpose.msra.mxu0 0.0
    %267 = vmatprep.subr.mxu0 0.0
    %268 = vmatpush1.xpose.msra.mxu0 0.0
    %269 = vmatprep.subr.mxu0 0.0
    %270 = vmatpush1.xpose.msra.mxu0 0.0
    %271 = vmatprep.subr.mxu0 0.0
    %272 = vmatpush1.xpose.msra.mxu0 0.0
    %273 = vmatprep.subr.mxu0 0.0
    %274 = vmatpush1.xpose.msra.mxu0 0.0
    %275 = vmatprep.subr.mxu0 0.0
    %276 = vmatpush1.xpose.msra.mxu0 0.0
    %277 = vmatprep.subr.mxu0 0.0
    %278 = vmatpush1.xpose.msra.mxu0 0.0
    %279 = vmatprep.subr.mxu0 0.0
    %280 = vmatpush1.xpose.msra.mxu0 0.0
    %281 = vmatprep.subr.mxu0 0.0
    %282 = vmatpush1.xpose.msra.mxu0 0.0
    %283 = vmatprep.subr.mxu0 0.0
    %284 = vmatpush1.xpose.msra.mxu0 0.0
    %285 = vmatprep.subr.mxu0 0.0
    %286 = vmatpush1.xpose.msra.mxu0 0.0
    %287 = vmatprep.subr.mxu0 0.0
    %288 = vmatpush1.xpose.msra.mxu0 0.0
    %289 = vmatprep.subr.mxu0 0.0
    %290 = vmatpush1.xpose.msra.mxu0 0.0
    %291 = vmatprep.subr.mxu0 0.0
    %292 = vmatpush1.xpose.msra.mxu0 0.0
    %293 = vmatprep.mubr.f32.mxu0 %v192
    %294 = vmatmul.mubr.f32.gmra.mrb[0].mxu0 %v191
    %v295 = vpop.f32.mrb[0].mxu0
    %v296 = vadd.f32 0.0, %v295
    %v297 = vpop.f32.mrb[0].mxu0
    %298 = vmatprep.mubr.f32.mxu0 %v194
    %299 = vmatmul.mubr.f32.gmra.mrb[0].mxu0 %v193
    %v300 = vpop.f32.mrb[0].mxu0
    %v301 = vadd.f32 0.0, %v300
    %v302 = vpop.f32.mrb[0].mxu0
    %303 = vdwg.mxu0
    %v304 = vadd.f32 %v195, %v296
    %v305 = vadd.f32 %v196, %v301
    %306 = vst [vmem:[#allocation2] sm:$0xff] %v304
    %307 = vst [vmem:[#allocation2 + $0x8] sm:$0xff] %v305
    // Predicated region
    $region38: #{tpu_custom_call.1} parent=1 // pred_check
      %p308 = pneg %p62
    $region39: #{tpu_custom_call.1} parent=1 // pred_check_branch
      %310 = sbr.rel (%p308) target = $region41
    $region40: #{tpu_custom_call.1} parent=1 // pred_region
      %v311 = vld [vmem:[#allocation2] sm:$0xff]
      %v312 = vld [vmem:[#allocation2 + $0x8] sm:$0xff]
      %v313 = vld [vmem:[%s4] sm:$0x1]
      %v315 = vlaneseq
      %v316 = vshrl.u32 %v315, 7
      %v317 = vsub.s32 0, %v316
      %v318 = vrot.slane %v313, %v317
      %v320 = vadd.f32 %v311, %v318
      %v321 = vadd.f32 %v312, %v318
      %322 = vst [vmem:[#allocation9] sm:$0xff] %v320
      %323 = vst [vmem:[#allocation9 + $0x8] sm:$0xff] %v321
    $region41: #{tpu_custom_call.1} parent=1 // pred_fallthru
      _
    // Predicated region
    $region42: #{tpu_custom_call.1} parent=1 // pred_check
      _
    $region43: #{tpu_custom_call.1} parent=1 // pred_check_branch
      %325 = sbr.rel (0) target = $region45
    $region44: #{tpu_custom_call.1} parent=1 // pred_region
      %s327 = ssub.s32 256, 256
      %328 = vsyncadd [#allocation5], %s327
      %s329 = sshll.u32 [#allocation9], 4
      %s330 = int_to_ptr.vmem [resolvable:$true] %s329
      %335 = dma.vmem_to_hbm [thread:$0]  %s330, 256, %s5, [#allocation5], 128, 128, 8
    $region45: #{tpu_custom_call.1} parent=1 // pred_fallthru
      _
    // Predicated region
    $region46: #{tpu_custom_call.1} parent=1 // pred_check
      _
    $region47: #{tpu_custom_call.1} parent=1 // pred_check_branch
      %337 = sbr.rel (0) target = $region49
    $region48: #{tpu_custom_call.1} parent=1 // pred_region
      %338 = dma.done [#allocation5], 256
    $region49: #{tpu_custom_call.1} parent=1 // pred_fallthru
      _
    %339 = vsyncpa [#allocation4], 1
    %340 = vsyncpa [#allocation7], 1
    %341 = vsyncpa [#allocation5], 1

</llo_original>
